<compile_context>
chip_gen: v5e
topology: v5e:2x2
jax: 0.10.0
libtpu: 0.0.40
codegen_flags: <defaults>
</compile_context>

<pallas_src>
import jax
import jax.numpy as jnp
from jax import lax
from jax.experimental import pallas as pl
from jax.experimental.pallas import tpu as pltpu


def _sigmoid(z):
    # Explicit logistic so kernel and reference use the identical formula.
    return 1.0 / (1.0 + jnp.exp(-z))


def phy_attention_kernel(x_ref, x_out_ref, temp_att_ref, wind_att_ref):
    x = x_ref[...]                                  # (N, C, L) fp32, full block
    N, C, L = x.shape

    tem = x[:, 0, :]                                # (N, L)
    u = x[:, 1, :]
    v = x[:, 2, :]

    # temperature attention: sigmoid(diff(tem) + |0.65 * 2|)
    temp_diff = tem[:, 1:] - tem[:, :-1] + jnp.float32(abs(0.65 * 2))
    temp_att = _sigmoid(temp_diff)                  # (N, L-1)

    # wind attention: sigmoid(|diff(sqrt(u^2 + v^2))|)
    wind = jnp.sqrt(u * u + v * v)                  # (N, L)
    wind_diff = jnp.abs(wind[:, 1:] - wind[:, :-1])
    wind_att = _sigmoid(wind_diff)                  # (N, L-1)

    # Full-width multipliers: position 0 -> 1.0 (left untouched), 1.. -> attention.
    ones_col = jnp.ones((N, 1), dtype=x.dtype)
    tmult = jnp.concatenate([ones_col, temp_att], axis=-1)   # (N, L)
    wmult = jnp.concatenate([ones_col, wind_att], axis=-1)   # (N, L)

    # Channel select: ch 0 -> temp multiplier, ch 1/2 -> wind multiplier,
    # any extra channels -> 1.0 (passthrough, matching the PyTorch module).
    ch = lax.broadcasted_iota(jnp.int32, (N, C, L), 1)
    mult = jnp.where(
        ch == 0, tmult[:, None, :],
        jnp.where((ch == 1) | (ch == 2), wmult[:, None, :], jnp.ones_like(x)))

    # One dense store per output.
    x_out_ref[...] = (x * mult).astype(x_out_ref.dtype)
    temp_att_ref[...] = temp_att.astype(temp_att_ref.dtype)
    wind_att_ref[...] = wind_att.astype(wind_att_ref.dtype)


def phy_attention_pallas(x):
    """x: (N, C, L) with C >= 3, L >= 2. Returns (x_out, temp_att, wind_att)."""
    N, C, L = x.shape
    assert C >= 3 and L >= 2

    out_shapes = (
        jax.ShapeDtypeStruct((N, C, L), x.dtype),
        jax.ShapeDtypeStruct((N, L - 1), x.dtype),
        jax.ShapeDtypeStruct((N, L - 1), x.dtype),
    )
    return pl.pallas_call(
        phy_attention_kernel,
        out_shape=out_shapes,
        # Single grid step; the whole (tiny) problem fits one block, so there is
        # no per-step pipeline overhead. (For very large N one would grid over
        # batch blocks and mark the axis "parallel" for v7x's two TensorCores.)
        grid=(1,),
        in_specs=[pl.BlockSpec((N, C, L), lambda i: (0, 0, 0))],
        out_specs=(
            pl.BlockSpec((N, C, L), lambda i: (0, 0, 0)),
            pl.BlockSpec((N, L - 1), lambda i: (0, 0)),
            pl.BlockSpec((N, L - 1), lambda i: (0, 0)),
        ),
        compiler_params=pltpu.CompilerParams(
            dimension_semantics=("arbitrary",)),
    )(x)


def phy_attention_ref(x):
    """Pure-JAX reference matching the PyTorch semantics."""
    tem = x[:, 0, :]
    u = x[:, 1, :]
    v = x[:, 2, :]
    temp_diff = (tem[:, 1:] - tem[:, :-1]) + jnp.float32(abs(0.65 * 2))
    temp_att = _sigmoid(temp_diff)
    wind = jnp.sqrt(u ** 2 + v ** 2)
    wind_diff = jnp.abs(wind[:, 1:] - wind[:, :-1])
    wind_att = _sigmoid(wind_diff)
    x_out = x
    x_out = x_out.at[:, 0, 1:].multiply(temp_att)
    x_out = x_out.at[:, 1, 1:].multiply(wind_att)
    x_out = x_out.at[:, 2, 1:].multiply(wind_att)
    return x_out, temp_att, wind_att


if __name__ == "__main__":
    key = jax.random.PRNGKey(0)

    # Small shapes implied by the forward: (batch, channels>=3, seq)
    N, C, L = 2, 4, 16
    x = jax.random.normal(key, (N, C, L), jnp.float32)

    x_out, temp_att, wind_att = phy_attention_pallas(x)
    x_out = jax.block_until_ready(x_out)
    temp_att = jax.block_until_ready(temp_att)
    wind_att = jax.block_until_ready(wind_att)

    x_ref, t_ref, w_ref = phy_attention_ref(x)

    assert x_out.shape == (N, C, L)
    assert temp_att.shape == (N, L - 1) and wind_att.shape == (N, L - 1)

    err_x = float(jnp.max(jnp.abs(x_out - x_ref)))
    err_t = float(jnp.max(jnp.abs(temp_att - t_ref)))
    err_w = float(jnp.max(jnp.abs(wind_att - w_ref)))
    assert err_x < 1e-5, f"x_out max abs error {err_x}"
    assert err_t < 1e-5, f"temp_att max abs error {err_t}"
    assert err_w < 1e-5, f"wind_att max abs error {err_w}"
    print("KERNEL_OK")
</pallas_src>

<mosaic_0001>
module attributes {stable_mosaic.version = 11 : i64} {
  func.func @phy_attention_kernel(%arg0: i32, %arg1: memref<2x4x16xf32, #tpu.memory_space<vmem>>, %arg2: memref<2x4x16xf32, #tpu.memory_space<vmem>>, %arg3: memref<2x15xf32, #tpu.memory_space<vmem>>, %arg4: memref<2x15xf32, #tpu.memory_space<vmem>>) attributes {dimension_semantics = [#tpu.dimension_semantics<arbitrary>], iteration_bounds = array<i64: 1>, scalar_prefetch = 0 : i64, scratch_operands = 0 : i64, tpu.core_type = #tpu.core_type<tc>, window_params = [{pipeline_mode = #tpu.pipeline_mode<synchronous>, transform_indices = @transform_0, window_bounds = array<i64: 2, 4, 16>}, {pipeline_mode = #tpu.pipeline_mode<synchronous>, transform_indices = @transform_1, window_bounds = array<i64: 2, 4, 16>}, {pipeline_mode = #tpu.pipeline_mode<synchronous>, transform_indices = @transform_2, window_bounds = array<i64: 2, 15>}, {pipeline_mode = #tpu.pipeline_mode<synchronous>, transform_indices = @transform_3, window_bounds = array<i64: 2, 15>}]} {
    %c0 = arith.constant 0 : index
    %c0_0 = arith.constant 0 : index
    %c0_1 = arith.constant 0 : index
    %0 = vector.load %arg1[%c0, %c0_0, %c0_1] : memref<2x4x16xf32, #tpu.memory_space<vmem>>, vector<2x4x16xf32>
    %1 = vector.extract_strided_slice %0 {offsets = [0, 0, 0], sizes = [2, 1, 16], strides = [1, 1, 1]} : vector<2x4x16xf32> to vector<2x1x16xf32>
    %2 = vector.shape_cast %1 : vector<2x1x16xf32> to vector<2x16xf32>
    %3 = vector.extract_strided_slice %0 {offsets = [0, 1, 0], sizes = [2, 1, 16], strides = [1, 1, 1]} : vector<2x4x16xf32> to vector<2x1x16xf32>
    %4 = vector.shape_cast %3 : vector<2x1x16xf32> to vector<2x16xf32>
    %5 = vector.extract_strided_slice %0 {offsets = [0, 2, 0], sizes = [2, 1, 16], strides = [1, 1, 1]} : vector<2x4x16xf32> to vector<2x1x16xf32>
    %6 = vector.shape_cast %5 : vector<2x1x16xf32> to vector<2x16xf32>
    %7 = vector.extract_strided_slice %2 {offsets = [0, 1], sizes = [2, 15], strides = [1, 1]} : vector<2x16xf32> to vector<2x15xf32>
    %8 = vector.extract_strided_slice %2 {offsets = [0, 0], sizes = [2, 15], strides = [1, 1]} : vector<2x16xf32> to vector<2x15xf32>
    %9 = arith.subf %7, %8 : vector<2x15xf32>
    %cst = arith.constant 1.300000e+00 : f32
    %10 = vector.broadcast %cst : f32 to vector<2x15xf32>
    %11 = arith.addf %9, %10 : vector<2x15xf32>
    %cst_2 = arith.constant 0.000000e+00 : f32
    %12 = vector.broadcast %cst_2 : f32 to vector<2x15xf32>
    %13 = arith.subf %12, %11 : vector<2x15xf32>
    %14 = math.exp %13 : vector<2x15xf32>
    %cst_3 = arith.constant 1.000000e+00 : f32
    %15 = vector.broadcast %cst_3 : f32 to vector<2x15xf32>
    %16 = arith.addf %15, %14 : vector<2x15xf32>
    %cst_4 = arith.constant 1.000000e+00 : f32
    %17 = vector.broadcast %cst_4 : f32 to vector<2x15xf32>
    %18 = arith.divf %17, %16 : vector<2x15xf32>
    %19 = arith.mulf %4, %4 : vector<2x16xf32>
    %20 = arith.mulf %6, %6 : vector<2x16xf32>
    %21 = arith.addf %19, %20 : vector<2x16xf32>
    %22 = math.sqrt %21 : vector<2x16xf32>
    %23 = vector.extract_strided_slice %22 {offsets = [0, 1], sizes = [2, 15], strides = [1, 1]} : vector<2x16xf32> to vector<2x15xf32>
    %24 = vector.extract_strided_slice %22 {offsets = [0, 0], sizes = [2, 15], strides = [1, 1]} : vector<2x16xf32> to vector<2x15xf32>
    %25 = arith.subf %23, %24 : vector<2x15xf32>
    %26 = math.absf %25 : vector<2x15xf32>
    %cst_5 = arith.constant 0.000000e+00 : f32
    %27 = vector.broadcast %cst_5 : f32 to vector<2x15xf32>
    %28 = arith.subf %27, %26 : vector<2x15xf32>
    %29 = math.exp %28 : vector<2x15xf32>
    %cst_6 = arith.constant 1.000000e+00 : f32
    %30 = vector.broadcast %cst_6 : f32 to vector<2x15xf32>
    %31 = arith.addf %30, %29 : vector<2x15xf32>
    %cst_7 = arith.constant 1.000000e+00 : f32
    %32 = vector.broadcast %cst_7 : f32 to vector<2x15xf32>
    %33 = arith.divf %32, %31 : vector<2x15xf32>
    %cst_8 = arith.constant 1.000000e+00 : f32
    %34 = vector.broadcast %cst_8 : f32 to vector<2x1xf32>
    %35 = tpu.concatenate %34, %18 in 1 : vector<2x1xf32>, vector<2x15xf32> -> vector<2x16xf32>
    %36 = tpu.concatenate %34, %33 in 1 : vector<2x1xf32>, vector<2x15xf32> -> vector<2x16xf32>
    %37 = tpu.iota {dimensions = array<i32: 1>} : vector<2x4x16xi32>
    %c0_i32 = arith.constant 0 : i32
    %38 = vector.broadcast %c0_i32 : i32 to vector<2x4x16xi32>
    %39 = arith.cmpi eq, %37, %38 : vector<2x4x16xi32>
    %40 = vector.shape_cast %35 : vector<2x16xf32> to vector<2x1x16xf32>
    %c1_i32 = arith.constant 1 : i32
    %41 = vector.broadcast %c1_i32 : i32 to vector<2x4x16xi32>
    %42 = arith.cmpi eq, %37, %41 : vector<2x4x16xi32>
    %c2_i32 = arith.constant 2 : i32
    %43 = vector.broadcast %c2_i32 : i32 to vector<2x4x16xi32>
    %44 = arith.cmpi eq, %37, %43 : vector<2x4x16xi32>
    %45 = arith.ori %42, %44 : vector<2x4x16xi1>
    %46 = vector.shape_cast %36 : vector<2x16xf32> to vector<2x1x16xf32>
    %cst_9 = arith.constant 1.000000e+00 : f32
    %47 = vector.broadcast %cst_9 : f32 to vector<2x4x16xf32>
    %48 = vector.shape_cast %46 : vector<2x1x16xf32> to vector<2x1x16xf32>
    %49 = vector.broadcast %48 : vector<2x1x16xf32> to vector<2x4x16xf32>
    %50 = arith.select %45, %49, %47 : vector<2x4x16xi1>, vector<2x4x16xf32>
    %51 = vector.shape_cast %40 : vector<2x1x16xf32> to vector<2x1x16xf32>
    %52 = vector.broadcast %51 : vector<2x1x16xf32> to vector<2x4x16xf32>
    %53 = arith.select %39, %52, %50 : vector<2x4x16xi1>, vector<2x4x16xf32>
    %54 = arith.mulf %0, %53 : vector<2x4x16xf32>
    %c0_10 = arith.constant 0 : index
    %c0_11 = arith.constant 0 : index
    %c0_12 = arith.constant 0 : index
    %55 = vector.load %arg2[%c0_10, %c0_11, %c0_12] : memref<2x4x16xf32, #tpu.memory_space<vmem>>, vector<2x4x16xf32>
    tpu.vector_store %arg2[%c0_10, %c0_11, %c0_12], %54 {strides = array<i32>} : memref<2x4x16xf32, #tpu.memory_space<vmem>>, vector<2x4x16xf32>,
    %c0_13 = arith.constant 0 : index
    %c0_14 = arith.constant 0 : index
    %56 = vector.load %arg3[%c0_13, %c0_14] : memref<2x15xf32, #tpu.memory_space<vmem>>, vector<2x15xf32>
    tpu.vector_store %arg3[%c0_13, %c0_14], %18 {strides = array<i32>} : memref<2x15xf32, #tpu.memory_space<vmem>>, vector<2x15xf32>,
    %c0_15 = arith.constant 0 : index
    %c0_16 = arith.constant 0 : index
    %57 = vector.load %arg4[%c0_15, %c0_16] : memref<2x15xf32, #tpu.memory_space<vmem>>, vector<2x15xf32>
    tpu.vector_store %arg4[%c0_15, %c0_16], %33 {strides = array<i32>} : memref<2x15xf32, #tpu.memory_space<vmem>>, vector<2x15xf32>,
    return
  }
  func.func @transform_0(%arg0: i32) -> (i32, i32, i32) {
    %c0_i32 = arith.constant 0 : i32
    %c0_i32_0 = arith.constant 0 : i32
    %c0_i32_1 = arith.constant 0 : i32
    %c0_i32_2 = arith.constant 0 : i32
    return %c0_i32, %c0_i32_0, %c0_i32_1 : i32, i32, i32
  }
  func.func @transform_1(%arg0: i32) -> (i32, i32, i32) {
    %c0_i32 = arith.constant 0 : i32
    %c0_i32_0 = arith.constant 0 : i32
    %c0_i32_1 = arith.constant 0 : i32
    %c0_i32_2 = arith.constant 0 : i32
    return %c0_i32, %c0_i32_0, %c0_i32_1 : i32, i32, i32
  }
  func.func @transform_2(%arg0: i32) -> (i32, i32) {
    %c0_i32 = arith.constant 0 : i32
    %c0_i32_0 = arith.constant 0 : i32
    %c0_i32_1 = arith.constant 0 : i32
    return %c0_i32, %c0_i32_0 : i32, i32
  }
  func.func @transform_3(%arg0: i32) -> (i32, i32) {
    %c0_i32 = arith.constant 0 : i32
    %c0_i32_0 = arith.constant 0 : i32
    %c0_i32_1 = arith.constant 0 : i32
    return %c0_i32, %c0_i32_0 : i32, i32
  }
}

</mosaic_0001>

<llo_original>
// kernel: tpu_custom_call.1
$region0: #{tpu_custom_call.1}
  #allocation0 [shape = 'u32[]', space=smem, size = 0x4, offset = 0x4, fixed_abs, tag = 'smem constant byte address 0x4 - core index']
  #allocation1 [shape = 'u32[72,128]{1,0:T(1,128)}', space=vmem, size = 0x9000, scoped, tag = 'internal scratch']
  %s0 = inlined_call_operand.hbm [shape: f32[2,4,16], index: 0, kind: input, shape index: {}]
  %s1 = inlined_call_operand.hbm [shape: f32[2,4,16], index: 1, kind: output, shape index: {0}]
  %s2 = inlined_call_operand.hbm [shape: f32[2,15], index: 2, kind: output, shape index: {1}]
  %s3 = inlined_call_operand.hbm [shape: f32[2,15], index: 3, kind: output, shape index: {2}]
  %4 = xla_tuple %s1, %s2, %s3
  %s5 = sld [smem:[#allocation0]]
  $region34: #{tpu_custom_call.1} parent=0
    _
  %s7 = ssub.s32 1, %s5
  %s8 = scalar_select 0, %s7, %s5
  $region1: #{tpu_custom_call.1} parent=0
    #allocation2 [shape = 'u8[4096]{0}', space=vmem, size = 0x1000, scoped, tag = 'input window, operand 0, single buffered']
    #allocation3 [shape = 's32[1]{0}', space=sflag, size = 0x4, scoped, tag = 'scoped memory for tpu_custom_call.1']
    #allocation4 [shape = 's32[1]{0}', space=sflag, size = 0x4, scoped, tag = 'scoped memory for tpu_custom_call.1']
    #allocation5 [shape = 'u8[4096]{0}', space=vmem, size = 0x1000, scoped, tag = 'output window, operand 0, single buffered']
    #allocation6 [shape = 'u8[1024]{0}', space=vmem, size = 0x400, scoped, tag = 'output window, operand 1, single buffered']
    #allocation7 [shape = 's32[1]{0}', space=sflag, size = 0x4, scoped, tag = 'scoped memory for tpu_custom_call.1']
    #allocation8 [shape = 'u8[1024]{0}', space=vmem, size = 0x400, scoped, tag = 'output window, operand 2, single buffered']
    %9 = vsyncpa [#allocation3], 0
    %10 = vsyncpa [#allocation4], 0
    %11 = vsyncpa [#allocation7], 0
    // Predicated region
    $region2: #{tpu_custom_call.1} parent=1 // pred_check
      _
    $region3: #{tpu_custom_call.1} parent=1 // pred_check_branch
      %13 = sbr.rel (0) target = $region5
    $region4: #{tpu_custom_call.1} parent=1 // pred_region
      %15 = vsyncadd [#allocation3], 0
      %s16 = sshll.u32 %s0, 4
      %s17 = int_to_ptr.hbm [resolvable:$true] %s16
      %s18 = sshll.u32 [#allocation2], 4
      %s19 = int_to_ptr.vmem [resolvable:$true] %s18
      %24 = dma.hbm_to_vmem [thread:$0]  %s17, 128, %s19, [#allocation3], 64, 64, 4
    $region5: #{tpu_custom_call.1} parent=1 // pred_fallthru
      _
    // Predicated region
    $region6: #{tpu_custom_call.1} parent=1 // pred_check
      _
    $region7: #{tpu_custom_call.1} parent=1 // pred_check_branch
      %26 = sbr.rel (0) target = $region9
    $region8: #{tpu_custom_call.1} parent=1 // pred_region
      %28 = dma.done [#allocation3], 128
    $region9: #{tpu_custom_call.1} parent=1 // pred_fallthru
      _
    %v29 = vld [vmem:[#allocation2] sm:$0xf]
    %v30 = vld [vmem:[#allocation2 + $0x4] sm:$0xf]
    %33 = vrot.lane.b32.xlu0 %v29, 1
    %v34 = vpop.permute.xlu0 %33
    %35 = vrot.lane.b32.xlu0 %v30, 1
    %v36 = vpop.permute.xlu0 %35
    %v39 = vsub.f32 %v29, %v34
    %v40 = vsub.f32 %v30, %v36
    %v41 = vadd.f32 %v39, 1.3
    %v42 = vadd.f32 %v40, 1.3
    %v43 = vsub.f32 0.0, %v41
    %v44 = vsub.f32 0.0, %v42
    %v45 = vmul.f32 %v43, 1.442695
    %v46 = vpow.pop %v45
    %v47 = vmul.f32 %v44, 1.442695
    %v48 = vpow.pop %v47
    %v49 = vadd.f32 %v46, 1.0
    %v50 = vadd.f32 %v48, 1.0
    %v51 = vrcp.pop %v49
    %v52 = vmul.f32 %v49, %v51
    %v53 = vsub.f32 1.0, %v52
    %v54 = vmul.f32 %v51, %v53
    %v55 = vadd.f32 %v51, %v54
    %vm56 = vweird.f32 %v49
    %vm57 = vweird.f32 %v51
    %vm58 = vmor %vm56, %vm57
    %v59 = vsel %vm58, %v51, %v55
    %v60 = vand.u32 2147483647, %v49
    %vm61 = vcmp.eq.f32.partialorder %v60, 8.507059e+37
    %v62 = vand.u32 %v49, 2147483648
    %v63 = vor.u32 1.1754944e-38, %v62
    %v64 = vsel %vm61, %v63, %v59
    %v65 = vmul.f32 1.0, %v64
    %v66 = vrcp.pop %v50
    %v67 = vmul.f32 %v50, %v66
    %v68 = vsub.f32 1.0, %v67
    %v69 = vmul.f32 %v66, %v68
    %v70 = vadd.f32 %v66, %v69
    %vm71 = vweird.f32 %v50
    %vm72 = vweird.f32 %v66
    %vm73 = vmor %vm71, %vm72
    %v74 = vsel %vm73, %v66, %v70
    %v75 = vand.u32 2147483647, %v50
    %vm76 = vcmp.eq.f32.partialorder %v75, 8.507059e+37
    %v77 = vand.u32 %v50, 2147483648
    %v78 = vor.u32 1.1754944e-38, %v77
    %v79 = vsel %vm76, %v78, %v74
    %v80 = vmul.f32 1.0, %v79
    %v81 = vmul.f32 %v29, %v29
    %v82 = vmul.f32 %v30, %v30
    %v85 = vrot.slane %v81, 1
    %v86 = vrot.slane %v82, 1
    %v89 = vadd.f32 %v81, %v85
    %v90 = vadd.f32 %v82, %v86
    %v91 = vrsqrt.pop %v89
    %v92 = vmul.f32 %v91, %v89
    %v93 = vmul.f32 %v92, %v91
    %v94 = vmul.f32 0.5, %v93
    %v95 = vsub.f32 1.5, %v94
    %v96 = vmul.f32 %v91, %v95
    %v97 = vmul.f32 %v89, %v96
    %vm98 = vcmp.eq.f32.partialorder %v89, inf
    %v99 = vsel %vm98, %v89, %v97
    %vm100 = vcmp.eq.f32.partialorder %v89, 0.0
    %v101 = vand.u32 %v89, 2147483648
    %v102 = vsel %vm100, %v101, %v99
    %v103 = vrsqrt.pop %v90
    %v104 = vmul.f32 %v103, %v90
    %v105 = vmul.f32 %v104, %v103
    %v106 = vmul.f32 0.5, %v105
    %v107 = vsub.f32 1.5, %v106
    %v108 = vmul.f32 %v103, %v107
    %v109 = vmul.f32 %v90, %v108
    %vm110 = vcmp.eq.f32.partialorder %v90, inf
    %v111 = vsel %vm110, %v90, %v109
    %vm112 = vcmp.eq.f32.partialorder %v90, 0.0
    %v113 = vand.u32 %v90, 2147483648
    %v114 = vsel %vm112, %v113, %v111
    %117 = vrot.lane.b32.xlu0 %v102, 1
    %v118 = vpop.permute.xlu0 %117
    %119 = vrot.lane.b32.xlu0 %v114, 1
    %v120 = vpop.permute.xlu0 %119
    %v123 = vsub.f32 %v102, %v118
    %v124 = vsub.f32 %v114, %v120
    %v125 = vand.u32 2147483647, %v123
    %v126 = vand.u32 2147483647, %v124
    %v127 = vsub.f32 0.0, %v125
    %v128 = vsub.f32 0.0, %v126
    %v129 = vmul.f32 %v127, 1.442695
    %v130 = vpow.pop %v129
    %v131 = vmul.f32 %v128, 1.442695
    %v132 = vpow.pop %v131
    %v133 = vadd.f32 %v130, 1.0
    %v134 = vadd.f32 %v132, 1.0
    %v135 = vrcp.pop %v133
    %v136 = vmul.f32 %v133, %v135
    %v137 = vsub.f32 1.0, %v136
    %v138 = vmul.f32 %v135, %v137
    %v139 = vadd.f32 %v135, %v138
    %vm140 = vweird.f32 %v133
    %vm141 = vweird.f32 %v135
    %vm142 = vmor %vm140, %vm141
    %v143 = vsel %vm142, %v135, %v139
    %v144 = vand.u32 2147483647, %v133
    %vm145 = vcmp.eq.f32.partialorder %v144, 8.507059e+37
    %v146 = vand.u32 %v133, 2147483648
    %v147 = vor.u32 1.1754944e-38, %v146
    %v148 = vsel %vm145, %v147, %v143
    %v149 = vmul.f32 1.0, %v148
    %v150 = vrcp.pop %v134
    %v151 = vmul.f32 %v134, %v150
    %v152 = vsub.f32 1.0, %v151
    %v153 = vmul.f32 %v150, %v152
    %v154 = vadd.f32 %v150, %v153
    %vm155 = vweird.f32 %v134
    %vm156 = vweird.f32 %v150
    %vm157 = vmor %vm155, %vm156
    %v158 = vsel %vm157, %v150, %v154
    %v159 = vand.u32 2147483647, %v134
    %vm160 = vcmp.eq.f32.partialorder %v159, 8.507059e+37
    %v161 = vand.u32 %v134, 2147483648
    %v162 = vor.u32 1.1754944e-38, %v161
    %v163 = vsel %vm160, %v162, %v158
    %v164 = vmul.f32 1.0, %v163
    %v167 = vrot.slane %v80, 7
    %vm168 = vcmask 1041409
    %v169 = vsel %vm168, %v167, %v65
    %vm171 = vcmask 7168
    %v172 = vsel %vm171, 1.0, %v169
    %v175 = vrot.slane %v149, 1
    %v176 = vsel %vm168, %v164, %v175
    %v178 = vsel %vm171, 1.0, %v176
    %v179 = vlaneseq
    %v180 = vshrl.u32 %v179, 7
    %vm181 = vcmp.eq.s32.totalorder %v180, 0
    %v183 = vrot.slane %v172, 1
    %vm184 = vcmp.eq.s32.totalorder %v180, 1
    %vm185 = vcmp.eq.s32.totalorder %v180, 2
    %vm186 = vmor %vm184, %vm185
    %v188 = vrot.slane %v178, 1
    %v189 = vperm.slane %v178, 0
    %v190 = vperm.slane %v188, 0
    %v193 = vsel %vm186, %v189, 1.0
    %v194 = vsel %vm186, %v190, 1.0
    %v195 = vperm.slane %v172, 0
    %v196 = vperm.slane %v183, 0
    %v199 = vsel %vm181, %v195, %v193
    %v200 = vsel %vm181, %v196, %v194
    %v201 = vmul.f32 %v29, %v199
    %v202 = vmul.f32 %v30, %v200
    %vm203 = vcmask 125952
    %204 = vst.msk [vmem:[#allocation5] sm:$0xf] %vm203, %v201
    %205 = vst.msk [vmem:[#allocation5 + $0x4] sm:$0xf] %vm203, %v202
    %206 = vrot.lane.b32.xlu0 %v169, 127
    %v207 = vpop.permute.xlu0 %206
    %vm209 = vcmask 115712
    %210 = vst.msk [vmem:[#allocation6] sm:$0x3] %vm209, %v207
    %v211 = vrot.slane %v164, 7
    %vm212 = vcmask 1042434
    %v213 = vsel %vm212, %v211, %v149
    %214 = vrot.lane.b32.xlu0 %v213, 127
    %v215 = vpop.permute.xlu0 %214
    %vm217 = vcmask 116737
    %218 = vst.msk [vmem:[#allocation8 - $0x1] sm:$0x6] %vm217, %v215
    // Predicated region
    $region10: #{tpu_custom_call.1} parent=1 // pred_check
      _
    $region11: #{tpu_custom_call.1} parent=1 // pred_check_branch
      %220 = sbr.rel (0) target = $region13
    $region12: #{tpu_custom_call.1} parent=1 // pred_region
      %222 = vsyncadd [#allocation4], 0
      %s223 = sshll.u32 [#allocation5], 4
      %s224 = int_to_ptr.vmem [resolvable:$true] %s223
      %s225 = sshll.u32 %s1, 4
      %s226 = int_to_ptr.hbm [resolvable:$true] %s225
      %231 = dma.vmem_to_hbm [thread:$0]  %s224, 128, %s226, [#allocation4], 64, 64, 4
    $region13: #{tpu_custom_call.1} parent=1 // pred_fallthru
      _
    // Predicated region
    $region14: #{tpu_custom_call.1} parent=1 // pred_check
      _
    $region15: #{tpu_custom_call.1} parent=1 // pred_check_branch
      %233 = sbr.rel (0) target = $region17
    $region16: #{tpu_custom_call.1} parent=1 // pred_region
      %235 = vsyncadd [#allocation7], 0
      %s237 = sshll.u32 [#allocation6], 4
      %s238 = int_to_ptr.vmem [resolvable:$true] %s237
      %s239 = sshll.u32 %s2, 4
      %s240 = int_to_ptr.hbm [resolvable:$true] %s239
      %242 = dma.vmem_to_hbm [thread:$0]  %s238, 32, %s240, [#allocation7]
    $region17: #{tpu_custom_call.1} parent=1 // pred_fallthru
      _
    // Predicated region
    $region18: #{tpu_custom_call.1} parent=1 // pred_check
      _
    $region19: #{tpu_custom_call.1} parent=1 // pred_check_branch
      %244 = sbr.rel (0) target = $region21
    $region20: #{tpu_custom_call.1} parent=1 // pred_region
      %246 = vsyncadd [#allocation7], 0
      %s248 = sshll.u32 [#allocation8], 4
      %s249 = int_to_ptr.vmem [resolvable:$true] %s248
      %s250 = sshll.u32 %s3, 4
      %s251 = int_to_ptr.hbm [resolvable:$true] %s250
      %253 = dma.vmem_to_hbm [thread:$0]  %s249, 32, %s251, [#allocation7]
    $region21: #{tpu_custom_call.1} parent=1 // pred_fallthru
      _
    // Predicated region
    $region22: #{tpu_custom_call.1} parent=1 // pred_check
      _
    $region23: #{tpu_custom_call.1} parent=1 // pred_check_branch
      %255 = sbr.rel (0) target = $region25
    $region24: #{tpu_custom_call.1} parent=1 // pred_region
      %257 = dma.done [#allocation4], 128
    $region25: #{tpu_custom_call.1} parent=1 // pred_fallthru
      _
    // Predicated region
    $region26: #{tpu_custom_call.1} parent=1 // pred_check
      _
    $region27: #{tpu_custom_call.1} parent=1 // pred_check_branch
      %259 = sbr.rel (0) target = $region29
    $region28: #{tpu_custom_call.1} parent=1 // pred_region
      %261 = dma.done [#allocation7], 32
    $region29: #{tpu_custom_call.1} parent=1 // pred_fallthru
      _
    // Predicated region
    $region30: #{tpu_custom_call.1} parent=1 // pred_check
      _
    $region31: #{tpu_custom_call.1} parent=1 // pred_check_branch
      %263 = sbr.rel (0) target = $region33
    $region32: #{tpu_custom_call.1} parent=1 // pred_region
      %265 = dma.done [#allocation7], 32
    $region33: #{tpu_custom_call.1} parent=1 // pred_fallthru
      _
    %266 = vsyncpa [#allocation3], 1
    %267 = vsyncpa [#allocation4], 1
    %268 = vsyncpa [#allocation7], 1

</llo_original>
